<compile_context>
chip_gen: v7x
topology: tpu7x:2x2x1
jax: 0.10.0
libtpu: 0.0.40
codegen_flags: <defaults>
</compile_context>

<pallas_src>
import jax
import jax.numpy as jnp
from jax.experimental import pallas as pl
from jax.experimental.pallas import tpu as pltpu


def _asc_kernel(x_ref, o_ref):
    # x_ref / o_ref: (N, rows_t, 128) VMEM tiles.  Reduce over axis 0
    # (PyTorch dim=0) in f32, then multiply by the exact reciprocal of the
    # per-column sum (one divide per column instead of N).
    xf = x_ref[...].astype(jnp.float32)
    s = jnp.sum(xf, axis=0, keepdims=True)   # one sum per column
    inv = 1.0 / s                            # exact reciprocal, once per column
    o_ref[...] = (xf * inv).astype(o_ref.dtype)


def _tpu_config():
    """Per-generation (input-block bytes, megacore split?, vmem limit)."""
    kind = ""
    try:
        kind = jax.devices()[0].device_kind.lower()
    except Exception:
        pass
    if "v7" in kind or "7x" in kind:
        block_bytes, multi_core = 4 << 20, True     # 2 TCs, 3.2 TB/s HBM
    elif "v6" in kind:
        block_bytes, multi_core = 4 << 20, False    # 1 TC, ~1.4 TB/s HBM
    elif "v5" in kind:
        block_bytes, multi_core = 2 << 20, False    # 16 MiB scoped default
    else:
        block_bytes, multi_core = 2 << 20, False
    # Double-buffered input + output blocks (~4x block) plus headroom.
    vmem_limit = 4 * block_bytes + (8 << 20)
    return block_bytes, multi_core, vmem_limit


def asc_forward(x: jax.Array, *,
                target_block_bytes: int | None = None,
                small_bypass_bytes: int = 256 << 10) -> jax.Array:
    """out = x / x.sum(axis=0), broadcast over axis 0 (any rank >= 1)."""
    orig_shape = x.shape

    # PyTorch true-division promotes integer/bool inputs to floating point.
    if not jnp.issubdtype(x.dtype, jnp.floating):
        x = x.astype(jnp.float32)
    dtype = x.dtype
    itemsize = x.dtype.itemsize

    n = int(orig_shape[0])
    cols = 1
    for d in orig_shape[1:]:
        cols *= int(d)
    total_bytes = n * cols * itemsize

    block_bytes, multi_core, vmem_limit = _tpu_config()
    if target_block_bytes is not None:
        block_bytes = int(target_block_bytes)

    sub = max(8, 32 // itemsize)   # dtype-native sublane multiple (8/16/32)

    # Tiny inputs (or <128 flattened columns): pallas_call launch + pipeline
    # setup dominates a sub-2 us memory stream; XLA's fused elementwise wins.
    if n == 0 or cols < 128 or total_bytes < small_bypass_bytes:
        return x / jnp.sum(x, axis=0)

    # The reduction axis (N) must live entirely inside one block.  If N is so
    # large that even the minimum (N, sub, 128) block double-buffered for
    # in+out cannot fit in VMEM, fall back to plain jnp.
    min_block_bytes = n * sub * 128 * itemsize
    if 4 * min_block_bytes > max(vmem_limit - (4 << 20), 8 << 20):
        # TODO(synk): a two-pass tree reduction over axis 0 would cover huge-N inputs.
        return x / jnp.sum(x, axis=0)

    x2 = x.reshape(n, cols)
    cols_main = (cols // 128) * 128
    rows = cols_main // 128
    rem = cols - cols_main

    # ---- packed (N, rows, 128) path for the 128-aligned bulk ----
    rt = block_bytes // max(1, n * 128 * itemsize)
    main_bytes = n * cols_main * itemsize
    if multi_core and main_bytes > (4 << 20):
        # Keep >= ~4 grid steps so both v7x TensorCores get work.
        rt = min(rt, max(sub, rows // 4))
    rt = max(sub, (rt // sub) * sub)   # dtype-native sublane multiple
    rt = min(rt, rows)                 # or the full dim (ragged tail is masked)

    out_main = pl.pallas_call(
        _asc_kernel,
        out_shape=jax.ShapeDtypeStruct((n, rows, 128), dtype),
        grid_spec=pltpu.PrefetchScalarGridSpec(
            num_scalar_prefetch=0,
            grid=(pl.cdiv(rows, rt),),
            in_specs=[pl.BlockSpec((n, rt, 128), lambda j: (0, j, 0))],
            out_specs=pl.BlockSpec((n, rt, 128), lambda j: (0, j, 0)),
        ),
        compiler_params=pltpu.CompilerParams(
            dimension_semantics=("parallel",),
            vmem_limit_bytes=vmem_limit,
        ),
    )(x2[:, :cols_main].reshape(n, rows, 128)).reshape(n, cols_main)

    if rem == 0:
        return out_main.reshape(orig_shape)

    # ---- <128-column remainder: tiny, handle in plain jnp and stitch back ----
    x_rem = x2[:, cols_main:]
    out_rem = x_rem / jnp.sum(x_rem, axis=0)
    return jnp.concatenate([out_main, out_rem], axis=1).reshape(orig_shape)


if __name__ == "__main__":
    key = jax.random.PRNGKey(0)
    k0, k1, k2, k3 = jax.random.split(key, 4)

    # Canonical small abundance-map shape; force the Pallas path (bypass off).
    x = jax.random.uniform(k0, (2, 4, 16, 16), dtype=jnp.float32) + 0.1
    out = jax.block_until_ready(asc_forward(x, small_bypass_bytes=0))
    ref = x / jnp.sum(x, axis=0)
    assert out.shape == x.shape and out.dtype == x.dtype
    assert jnp.allclose(out, ref, rtol=1e-5, atol=1e-6)

    # Same input through the default path (tiny-input jnp bypass).
    out_b = jax.block_until_ready(asc_forward(x))
    assert jnp.allclose(out_b, ref, rtol=1e-5, atol=1e-6)

    # Larger 128-aligned input: packed (N, rows, 128) path.
    y = jax.random.uniform(k1, (4, 3, 256, 128), dtype=jnp.float32) + 0.1
    out_y = jax.block_until_ready(asc_forward(y))
    assert jnp.allclose(out_y, y / jnp.sum(y, axis=0), rtol=1e-5, atol=1e-6)

    # Ragged input above the bypass threshold: packed bulk + <128-col remainder.
    z = jax.random.uniform(k2, (2, 300, 367), dtype=jnp.float32) + 0.1
    out_z = jax.block_until_ready(asc_forward(z))
    assert jnp.allclose(out_z, z / jnp.sum(z, axis=0), rtol=1e-5, atol=1e-6)

    # bf16 input: dtype-native sublane rounding (rt multiple of 16).
    w = (jax.random.uniform(k3, (3, 4, 512, 128), dtype=jnp.float32) + 0.1).astype(jnp.bfloat16)
    out_w = jax.block_until_ready(asc_forward(w))
    wf = w.astype(jnp.float32)
    ref_w = (wf / jnp.sum(wf, axis=0)).astype(jnp.bfloat16)
    assert out_w.dtype == jnp.bfloat16
    assert jnp.allclose(out_w.astype(jnp.float32), ref_w.astype(jnp.float32),
                        rtol=2e-2, atol=2e-2)

    # Integer input: promoted to float32, like PyTorch true division.
    xi = jax.random.randint(jax.random.PRNGKey(1), (2, 4, 16, 16), 1, 10, dtype=jnp.int32)
    out_i = jax.block_until_ready(asc_forward(xi, small_bypass_bytes=0))
    ref_i = xi.astype(jnp.float32) / jnp.sum(xi, axis=0).astype(jnp.float32)
    assert out_i.dtype == jnp.float32
    assert jnp.allclose(out_i, ref_i, rtol=1e-5, atol=1e-6)

    print("KERNEL_OK")
</pallas_src>

<mosaic_0001>
module attributes {stable_mosaic.version = 11 : i64} {
  func.func @_asc_kernel(%arg0: i32, %arg1: memref<2x8x128xf32, #tpu.memory_space<vmem>>, %arg2: memref<2x8x128xf32, #tpu.memory_space<vmem>>) attributes {dimension_semantics = [#tpu.dimension_semantics<parallel>], iteration_bounds = array<i64: 1>, scalar_prefetch = 0 : i64, scratch_operands = 0 : i64, tpu.core_type = #tpu.core_type<tc>, window_params = [{transform_indices = @transform_0, window_bounds = array<i64: 2, 8, 128>}, {transform_indices = @transform_1, window_bounds = array<i64: 2, 8, 128>}]} {
    %c0 = arith.constant 0 : index
    %c0_0 = arith.constant 0 : index
    %c0_1 = arith.constant 0 : index
    %0 = vector.load %arg1[%c0, %c0_0, %c0_1] : memref<2x8x128xf32, #tpu.memory_space<vmem>>, vector<2x8x128xf32>
    %cst = arith.constant dense<0.000000e+00> : vector<8x128xf32>
    %1 = vector.multi_reduction <add>, %0, %cst [0] : vector<2x8x128xf32> to vector<8x128xf32>
    %2 = vector.shape_cast %1 : vector<8x128xf32> to vector<1x8x128xf32>
    %cst_2 = arith.constant 1.000000e+00 : f32
    %3 = vector.broadcast %cst_2 : f32 to vector<1x8x128xf32>
    %4 = arith.divf %3, %2 : vector<1x8x128xf32>
    %5 = vector.broadcast %4 : vector<1x8x128xf32> to vector<2x8x128xf32>
    %6 = arith.mulf %0, %5 : vector<2x8x128xf32>
    %c0_3 = arith.constant 0 : index
    %c0_4 = arith.constant 0 : index
    %c0_5 = arith.constant 0 : index
    %7 = vector.load %arg2[%c0_3, %c0_4, %c0_5] : memref<2x8x128xf32, #tpu.memory_space<vmem>>, vector<2x8x128xf32>
    tpu.vector_store %arg2[%c0_3, %c0_4, %c0_5], %6 {strides = array<i32>} : memref<2x8x128xf32, #tpu.memory_space<vmem>>, vector<2x8x128xf32>,
    return
  }
  func.func @transform_0(%arg0: i32) -> (i32, i32, i32) {
    %c0_i32 = arith.constant 0 : i32
    %c0_i32_0 = arith.constant 0 : i32
    %c0_i32_1 = arith.constant 0 : i32
    return %c0_i32, %arg0, %c0_i32_0 : i32, i32, i32
  }
  func.func @transform_1(%arg0: i32) -> (i32, i32, i32) {
    %c0_i32 = arith.constant 0 : i32
    %c0_i32_0 = arith.constant 0 : i32
    %c0_i32_1 = arith.constant 0 : i32
    return %c0_i32, %arg0, %c0_i32_0 : i32, i32, i32
  }
}

</mosaic_0001>

<llo_original>
// kernel: tpu_custom_call.1
$region0: #{tpu_custom_call.1}
  #allocation0 [shape = 'u32[]', space=smem, size = 0x4, offset = 0x4, fixed_abs, tag = 'smem constant byte address 0x4 - core index']
  #allocation1 [shape = 'u32[144,128]{1,0:T(1,128)}', space=vmem, size = 0x12000, scoped, tag = 'internal scratch']
  %s0 = inlined_call_operand.hbm [shape: f32[2,8,128], index: 0, kind: input, shape index: {}]
  %s1 = inlined_call_operand.hbm [shape: f32[2,8,128], index: 1, kind: output, shape index: {}]
  %s2 = sld [smem:[#allocation0]]
  $region18: #{tpu_custom_call.1} parent=0
    _
  %s4 = ssub.s32 1, %s2
  %s5 = scalar_select 0, %s4, %s2
  $region1: #{tpu_custom_call.1} parent=0
    #allocation2 [shape = 'u8[8192]{0}', space=vmem, size = 0x2000, scoped, tag = 'input window, operand 0, single buffered']
    #allocation3 [shape = 's32[1]{0}', space=sflag, size = 0x4, scoped, tag = 'scoped memory for tpu_custom_call.1']
    #allocation4 [shape = 's32[1]{0}', space=sflag, size = 0x4, scoped, tag = 'scoped memory for tpu_custom_call.1']
    #allocation5 [shape = 'u8[8192]{0}', space=vmem, size = 0x2000, scoped, tag = 'output window, operand 0, single buffered']
    %6 = vsyncpa [#allocation3], 0
    %7 = vsyncpa [#allocation4], 0
    // Predicated region
    $region2: #{tpu_custom_call.1} parent=1 // pred_check
      _
    $region3: #{tpu_custom_call.1} parent=1 // pred_check_branch
      %9 = sbr.rel (0) target = $region5
    $region4: #{tpu_custom_call.1} parent=1 // pred_region
      %s11 = ssub.s32 256, 256
      %12 = vsyncadd [#allocation3], %s11
      %s13 = sshll.u32 [#allocation2], 4
      %s14 = int_to_ptr.vmem [resolvable:$true] %s13
      %19 = dma.hbm_to_vmem [thread:$0]  %s0, 256, %s14, [#allocation3], 128, 128, 8
    $region5: #{tpu_custom_call.1} parent=1 // pred_fallthru
      _
    // Predicated region
    $region6: #{tpu_custom_call.1} parent=1 // pred_check
      _
    $region7: #{tpu_custom_call.1} parent=1 // pred_check_branch
      %21 = sbr.rel (0) target = $region9
    $region8: #{tpu_custom_call.1} parent=1 // pred_region
      %22 = dma.done [#allocation3], 256
    $region9: #{tpu_custom_call.1} parent=1 // pred_fallthru
      _
    %v23 = vld [vmem:[#allocation2] sm:$0xff]
    %v24 = vld [vmem:[#allocation2 + $0x8] sm:$0xff]
    %v25 = vadd.f32 %v23, %v24
    %v26 = vrcp.pop %v25
    %v27 = vmul.f32 1.0, %v26
    %v28 = vmul.f32 %v23, %v27
    %v29 = vmul.f32 %v24, %v27
    %30 = vst [vmem:[#allocation5] sm:$0xff] %v28
    %31 = vst [vmem:[#allocation5 + $0x8] sm:$0xff] %v29
    // Predicated region
    $region10: #{tpu_custom_call.1} parent=1 // pred_check
      _
    $region11: #{tpu_custom_call.1} parent=1 // pred_check_branch
      %33 = sbr.rel (0) target = $region13
    $region12: #{tpu_custom_call.1} parent=1 // pred_region
      %s35 = ssub.s32 256, 256
      %36 = vsyncadd [#allocation4], %s35
      %s37 = sshll.u32 [#allocation5], 4
      %s38 = int_to_ptr.vmem [resolvable:$true] %s37
      %43 = dma.vmem_to_hbm [thread:$0]  %s38, 256, %s1, [#allocation4], 128, 128, 8
    $region13: #{tpu_custom_call.1} parent=1 // pred_fallthru
      _
    // Predicated region
    $region14: #{tpu_custom_call.1} parent=1 // pred_check
      _
    $region15: #{tpu_custom_call.1} parent=1 // pred_check_branch
      %45 = sbr.rel (0) target = $region17
    $region16: #{tpu_custom_call.1} parent=1 // pred_region
      %46 = dma.done [#allocation4], 256
    $region17: #{tpu_custom_call.1} parent=1 // pred_fallthru
      _
    %47 = vsyncpa [#allocation3], 1
    %48 = vsyncpa [#allocation4], 1

</llo_original>
